<compile_context>
chip_gen: v7x
topology: tpu7x:2x2x1
jax: 0.10.0
libtpu: 0.0.40
codegen_flags: <defaults>
</compile_context>

<pallas_src>
import jax
import jax.numpy as jnp
from jax.experimental import pallas as pl
from jax.experimental.pallas import tpu as pltpu


def _round_up(n, m):
    return ((n + m - 1) // m) * m


# ----------------------------------------------------------------------------
# Kernels
# ----------------------------------------------------------------------------
def _fused_linear_kernel(x_ref, w_ref, b_ref, o_ref):
    """Whole problem resident in VMEM: y = x @ w + b in one grid step."""
    o_ref[...] = (
        jnp.dot(x_ref[...], w_ref[...], preferred_element_type=jnp.float32)
        + b_ref[...]
    ).astype(o_ref.dtype)


def _tiled_linear_kernel(x_ref, w_ref, b_ref, o_ref, acc_ref):
    """Tiled matmul + bias. Grid = (M//tm, N//tn, K//tk); K is the reduction axis."""
    k = pl.program_id(2)

    @pl.when(k == 0)
    def _():
        acc_ref[...] = jnp.zeros_like(acc_ref)

    acc_ref[...] += jnp.dot(
        x_ref[...], w_ref[...], preferred_element_type=jnp.float32
    )

    @pl.when(k == pl.num_programs(2) - 1)
    def _():
        # bias tile is (1, tn); broadcasts over the tm rows of the output tile.
        o_ref[...] = (acc_ref[...] + b_ref[...]).astype(o_ref.dtype)


# ----------------------------------------------------------------------------
# Parameter prep (one-time, outside the per-step forward path)
# ----------------------------------------------------------------------------
def prep_params(weight, bias, param_dtype=None):
    """weight: [C, D] (PyTorch layout), bias: [C].

    Returns (w_t [D, C], b2d [1, C]).  The transpose is materialized ONCE here
    rather than on every forward call.  Optionally cast the weight to bf16
    (f32 MXU accumulation is kept inside the kernel)."""
    w_t = jnp.asarray(weight).T                     # [D, C]
    b2d = jnp.asarray(bias).reshape(1, -1)          # [1, C]
    if param_dtype is not None:
        w_t = w_t.astype(param_dtype)
    return w_t, b2d


# ----------------------------------------------------------------------------
# Forward
# ----------------------------------------------------------------------------
def adaptive_mlp_forward(x, w_t, b2d, *, tm=None, tn=None, tk=None,
                         single_step_bytes=8 * 1024 * 1024):
    """x: [B, D]; w_t: [D, C] (pre-transposed); b2d: [1, C]."""
    B, D = x.shape
    D2, C = w_t.shape
    assert D == D2 and b2d.shape == (1, C)
    out_dtype = x.dtype

    x_isz = jnp.dtype(x.dtype).itemsize
    w_isz = jnp.dtype(w_t.dtype).itemsize
    b_isz = jnp.dtype(b2d.dtype).itemsize
    o_isz = jnp.dtype(out_dtype).itemsize

    cost = pl.CostEstimate(
        flops=2 * B * D * C,
        transcendentals=0,
        bytes_accessed=B * D * x_isz + D * C * w_isz + C * b_isz + B * C * o_isz,
    )

    total_bytes = B * D * x_isz + D * C * w_isz + C * b_isz + B * C * o_isz
    if total_bytes <= single_step_bytes:
        # Single-step path: whole arrays in VMEM, no grid, no accumulator.
        return pl.pallas_call(
            _fused_linear_kernel,
            out_shape=jax.ShapeDtypeStruct((B, C), out_dtype),
            cost_estimate=cost,
        )(x, w_t, b2d)

    # ---------------- Tiled path for larger shapes ----------------
    tm = 256 if tm is None else tm
    tn = 256 if tn is None else tn
    tk = 512 if tk is None else tk
    tm = min(tm, _round_up(B, 8))        # sublane-aligned
    tn = min(tn, _round_up(C, 128))      # lane-dense (never below 128)
    tk = min(tk, _round_up(D, 128))

    Bp, Cp, Dp = _round_up(B, tm), _round_up(C, tn), _round_up(D, tk)
    if (Bp, Dp) != (B, D):
        x = jnp.pad(x, ((0, Bp - B), (0, Dp - D)))
    if (Dp, Cp) != (D, C):
        w_t = jnp.pad(w_t, ((0, Dp - D), (0, Cp - C)))
    if Cp != C:
        b2d = jnp.pad(b2d, ((0, 0), (0, Cp - C)))

    grid = (Bp // tm, Cp // tn, Dp // tk)

    # VMEM budget: double-buffered input tiles + resident output + f32 acc.
    vmem_est = (2 * tm * tk * x_isz + 2 * tk * tn * w_isz + 2 * tn * b_isz
                + 2 * tm * tn * o_isz + tm * tn * 4)
    vmem_limit = int(min(max(2 * vmem_est, 32 * 1024 * 1024), 48 * 1024 * 1024))

    out = pl.pallas_call(
        _tiled_linear_kernel,
        out_shape=jax.ShapeDtypeStruct((Bp, Cp), out_dtype),
        grid_spec=pltpu.PrefetchScalarGridSpec(
            num_scalar_prefetch=0,
            grid=grid,
            in_specs=[
                pl.BlockSpec((tm, tk), lambda i, j, k: (i, k)),   # x tile
                pl.BlockSpec((tk, tn), lambda i, j, k: (k, j)),   # w^T tile
                pl.BlockSpec((1, tn), lambda i, j, k: (0, j)),    # bias tile
            ],
            out_specs=pl.BlockSpec((tm, tn), lambda i, j, k: (i, j)),
            scratch_shapes=[pltpu.VMEM((tm, tn), jnp.float32)],
        ),
        compiler_params=pltpu.CompilerParams(
            dimension_semantics=("parallel", "parallel", "arbitrary"),
            vmem_limit_bytes=vmem_limit,
        ),
        cost_estimate=cost,
    )(x, w_t, b2d)
    return out[:B, :C]


if __name__ == "__main__":
    # Shapes consistent with the module: input_dim=512, num_classes=128, batch=8.
    B, D, C = 8, 512, 128

    key = jax.random.PRNGKey(0)
    kx, kw, kb = jax.random.split(key, 3)

    x = jax.random.normal(kx, (B, D), dtype=jnp.float32)
    bound = 1.0 / jnp.sqrt(jnp.float32(D))
    weight = jax.random.uniform(kw, (C, D), minval=-bound, maxval=bound, dtype=jnp.float32)
    bias = jax.random.uniform(kb, (C,), minval=-bound, maxval=bound, dtype=jnp.float32)

    # One-time parameter prep (transpose hoisted out of the forward path).
    # For bandwidth-bound serving, pass param_dtype=jnp.bfloat16 here.
    w_t, b2d = prep_params(weight, bias)
    w_t = jax.block_until_ready(w_t)

    fwd = jax.jit(adaptive_mlp_forward)
    out = fwd(x, w_t, b2d)
    out = jax.block_until_ready(out)

    # Cross-check against plain JAX reference of the PyTorch forward.
    ref = x @ weight.T + bias
    assert out.shape == (B, C)
    assert jnp.allclose(out, ref, atol=1e-4, rtol=1e-4)

    print("KERNEL_OK")
</pallas_src>

<mosaic_0001>
module attributes {stable_mosaic.version = 11 : i64} {
  func.func @_fused_linear_kernel(%arg0: memref<8x512xf32, #tpu.memory_space<vmem>>, %arg1: memref<512x128xf32, #tpu.memory_space<vmem>>, %arg2: memref<1x128xf32, #tpu.memory_space<vmem>>, %arg3: memref<8x128xf32, #tpu.memory_space<vmem>>) attributes {dimension_semantics = [], scalar_prefetch = 0 : i64, scratch_operands = 0 : i64, tpu.core_type = #tpu.core_type<tc>} {
    %c0 = arith.constant 0 : index
    %c0_0 = arith.constant 0 : index
    %0 = vector.load %arg0[%c0, %c0_0] : memref<8x512xf32, #tpu.memory_space<vmem>>, vector<8x512xf32>
    %c0_1 = arith.constant 0 : index
    %c0_2 = arith.constant 0 : index
    %1 = vector.load %arg1[%c0_1, %c0_2] : memref<512x128xf32, #tpu.memory_space<vmem>>, vector<512x128xf32>
    %cst = arith.constant dense<0.000000e+00> : vector<8x128xf32>
    %2 = tpu.matmul %0, %1, %cst {dimension_numbers = #tpu.dot_dimension_numbers<[1], [0], [0], [1], [0, 0, 1, 1], [], []>} : vector<8x512xf32>, vector<512x128xf32>, vector<8x128xf32> -> vector<8x128xf32>
    %c0_3 = arith.constant 0 : index
    %c0_4 = arith.constant 0 : index
    %3 = vector.load %arg2[%c0_3, %c0_4] : memref<1x128xf32, #tpu.memory_space<vmem>>, vector<1x128xf32>
    %4 = vector.broadcast %3 : vector<1x128xf32> to vector<8x128xf32>
    %5 = arith.addf %2, %4 : vector<8x128xf32>
    %c0_5 = arith.constant 0 : index
    %c0_6 = arith.constant 0 : index
    %6 = vector.load %arg3[%c0_5, %c0_6] : memref<8x128xf32, #tpu.memory_space<vmem>>, vector<8x128xf32>
    tpu.vector_store %arg3[%c0_5, %c0_6], %5 {strides = array<i32>} : memref<8x128xf32, #tpu.memory_space<vmem>>, vector<8x128xf32>,
    return
  }
}

</mosaic_0001>

<llo_original>
// kernel: adaptive_mlp_forward.1
$region0: #{adaptive_mlp_forward.1}
  #allocation0 [shape = 'u32[]', space=smem, size = 0x4, offset = 0x4, fixed_abs, tag = 'smem constant byte address 0x4 - core index']
  #allocation1 [shape = 'u32[144,128]{1,0:T(1,128)}', space=vmem, size = 0x12000, scoped, tag = 'internal scratch']
  %s0 = inlined_call_operand.hbm [shape: f32[8,512], index: 0, kind: input, shape index: {}]
  %s1 = inlined_call_operand.hbm [shape: f32[512,128], index: 1, kind: input, shape index: {}]
  %s2 = inlined_call_operand.vmem [shape: f32[1,128], index: 2, kind: input, shape index: {}]
  %s3 = inlined_call_operand.hbm [shape: f32[8,128], index: 3, kind: output, shape index: {}]
  %s4 = sld [smem:[#allocation0]]
  $region30: #{adaptive_mlp_forward.1} parent=0
    _
  %s6 = ssub.s32 1, %s4
  %s7 = scalar_select 0, %s6, %s4
  $region1: #{adaptive_mlp_forward.1} parent=0
    #allocation2 [shape = 'u8[16384]{0}', space=vmem, size = 0x4000, scoped, tag = 'input window, operand 0, single buffered']
    #allocation3 [shape = 's32[1]{0}', space=sflag, size = 0x4, scoped, tag = 'scoped memory for adaptive_mlp_forward.1']
    #allocation4 [shape = 's32[1]{0}', space=sflag, size = 0x4, scoped, tag = 'scoped memory for adaptive_mlp_forward.1']
    #allocation5 [shape = 'u8[262144]{0}', space=vmem, size = 0x40000, scoped, tag = 'input window, operand 1, single buffered']
    #allocation6 [shape = 's32[1]{0}', space=sflag, size = 0x4, scoped, tag = 'scoped memory for adaptive_mlp_forward.1']
    #allocation7 [shape = 'u8[4096]{0}', space=vmem, size = 0x1000, scoped, tag = 'output window, operand 0, single buffered']
    %8 = vsyncpa [#allocation3], 0
    %9 = vsyncpa [#allocation6], 0
    %10 = vsyncpa [#allocation4], 0
    // Predicated region
    $region2: #{adaptive_mlp_forward.1} parent=1 // pred_check
      _
    $region3: #{adaptive_mlp_forward.1} parent=1 // pred_check_branch
      %12 = sbr.rel (0) target = $region5
    $region4: #{adaptive_mlp_forward.1} parent=1 // pred_region
      %s14 = ssub.s32 512, 512
      %15 = vsyncadd [#allocation3], %s14
      %s17 = sshll.u32 [#allocation2], 4
      %s18 = int_to_ptr.vmem [resolvable:$true] %s17
      %20 = dma.hbm_to_vmem [thread:$0]  %s0, 512, %s18, [#allocation3]
    $region5: #{adaptive_mlp_forward.1} parent=1 // pred_fallthru
      _
    // Predicated region
    $region6: #{adaptive_mlp_forward.1} parent=1 // pred_check
      _
    $region7: #{adaptive_mlp_forward.1} parent=1 // pred_check_branch
      %22 = sbr.rel (0) target = $region9
    $region8: #{adaptive_mlp_forward.1} parent=1 // pred_region
      %s24 = ssub.s32 8192, 8192
      %25 = vsyncadd [#allocation6], %s24
      %s26 = sshll.u32 [#allocation5], 4
      %s27 = int_to_ptr.vmem [resolvable:$true] %s26
      %32 = dma.hbm_to_vmem [thread:$0]  %s1, 8192, %s27, [#allocation6], 128, 128, 8
    $region9: #{adaptive_mlp_forward.1} parent=1 // pred_fallthru
      _
    // Predicated region
    $region10: #{adaptive_mlp_forward.1} parent=1 // pred_check
      _
    $region11: #{adaptive_mlp_forward.1} parent=1 // pred_check_branch
      %34 = sbr.rel (0) target = $region13
    $region12: #{adaptive_mlp_forward.1} parent=1 // pred_region
      _
    $region13: #{adaptive_mlp_forward.1} parent=1 // pred_fallthru
      _
    // Predicated region
    $region14: #{adaptive_mlp_forward.1} parent=1 // pred_check
      _
    $region15: #{adaptive_mlp_forward.1} parent=1 // pred_check_branch
      %36 = sbr.rel (0) target = $region17
    $region16: #{adaptive_mlp_forward.1} parent=1 // pred_region
      %37 = dma.done [#allocation3], 512
    $region17: #{adaptive_mlp_forward.1} parent=1 // pred_fallthru
      _
    // Predicated region
    $region18: #{adaptive_mlp_forward.1} parent=1 // pred_check
      _
    $region19: #{adaptive_mlp_forward.1} parent=1 // pred_check_branch
      %39 = sbr.rel (0) target = $region21
    $region20: #{adaptive_mlp_forward.1} parent=1 // pred_region
      %40 = dma.done [#allocation6], 8192
    $region21: #{adaptive_mlp_forward.1} parent=1 // pred_fallthru
      _
    %v41 = vld [vmem:[#allocation2] sm:$0xff]
    %v42 = vld [vmem:[#allocation2 + $0x8] sm:$0xff]
    %v43 = vld [vmem:[#allocation2 + $0x10] sm:$0xff]
    %v44 = vld [vmem:[#allocation2 + $0x18] sm:$0xff]
    %v45 = vld [vmem:[#allocation5] sm:$0xff]
    %v46 = vld [vmem:[#allocation5 + $0x8] sm:$0xff]
    %v47 = vld [vmem:[#allocation5 + $0x10] sm:$0xff]
    %v48 = vld [vmem:[#allocation5 + $0x18] sm:$0xff]
    %v49 = vld [vmem:[#allocation5 + $0x20] sm:$0xff]
    %v50 = vld [vmem:[#allocation5 + $0x28] sm:$0xff]
    %v51 = vld [vmem:[#allocation5 + $0x30] sm:$0xff]
    %v52 = vld [vmem:[#allocation5 + $0x38] sm:$0xff]
    %v53 = vld [vmem:[#allocation5 + $0x40] sm:$0xff]
    %v54 = vld [vmem:[#allocation5 + $0x48] sm:$0xff]
    %v55 = vld [vmem:[#allocation5 + $0x50] sm:$0xff]
    %v56 = vld [vmem:[#allocation5 + $0x58] sm:$0xff]
    %v57 = vld [vmem:[#allocation5 + $0x60] sm:$0xff]
    %v58 = vld [vmem:[#allocation5 + $0x68] sm:$0xff]
    %v59 = vld [vmem:[#allocation5 + $0x70] sm:$0xff]
    %v60 = vld [vmem:[#allocation5 + $0x78] sm:$0xff]
    %v61 = vld [vmem:[#allocation5 + $0x80] sm:$0xff]
    %v62 = vld [vmem:[#allocation5 + $0x88] sm:$0xff]
    %v63 = vld [vmem:[#allocation5 + $0x90] sm:$0xff]
    %v64 = vld [vmem:[#allocation5 + $0x98] sm:$0xff]
    %v65 = vld [vmem:[#allocation5 + $0xa0] sm:$0xff]
    %v66 = vld [vmem:[#allocation5 + $0xa8] sm:$0xff]
    %v67 = vld [vmem:[#allocation5 + $0xb0] sm:$0xff]
    %v68 = vld [vmem:[#allocation5 + $0xb8] sm:$0xff]
    %v69 = vld [vmem:[#allocation5 + $0xc0] sm:$0xff]
    %v70 = vld [vmem:[#allocation5 + $0xc8] sm:$0xff]
    %v71 = vld [vmem:[#allocation5 + $0xd0] sm:$0xff]
    %v72 = vld [vmem:[#allocation5 + $0xd8] sm:$0xff]
    %v73 = vld [vmem:[#allocation5 + $0xe0] sm:$0xff]
    %v74 = vld [vmem:[#allocation5 + $0xe8] sm:$0xff]
    %v75 = vld [vmem:[#allocation5 + $0xf0] sm:$0xff]
    %v76 = vld [vmem:[#allocation5 + $0xf8] sm:$0xff]
    %v77 = vld [vmem:[#allocation5 + $0x100] sm:$0xff]
    %v78 = vld [vmem:[#allocation5 + $0x108] sm:$0xff]
    %v79 = vld [vmem:[#allocation5 + $0x110] sm:$0xff]
    %v80 = vld [vmem:[#allocation5 + $0x118] sm:$0xff]
    %v81 = vld [vmem:[#allocation5 + $0x120] sm:$0xff]
    %v82 = vld [vmem:[#allocation5 + $0x128] sm:$0xff]
    %v83 = vld [vmem:[#allocation5 + $0x130] sm:$0xff]
    %v84 = vld [vmem:[#allocation5 + $0x138] sm:$0xff]
    %v85 = vld [vmem:[#allocation5 + $0x140] sm:$0xff]
    %v86 = vld [vmem:[#allocation5 + $0x148] sm:$0xff]
    %v87 = vld [vmem:[#allocation5 + $0x150] sm:$0xff]
    %v88 = vld [vmem:[#allocation5 + $0x158] sm:$0xff]
    %v89 = vld [vmem:[#allocation5 + $0x160] sm:$0xff]
    %v90 = vld [vmem:[#allocation5 + $0x168] sm:$0xff]
    %v91 = vld [vmem:[#allocation5 + $0x170] sm:$0xff]
    %v92 = vld [vmem:[#allocation5 + $0x178] sm:$0xff]
    %v93 = vld [vmem:[#allocation5 + $0x180] sm:$0xff]
    %v94 = vld [vmem:[#allocation5 + $0x188] sm:$0xff]
    %v95 = vld [vmem:[#allocation5 + $0x190] sm:$0xff]
    %v96 = vld [vmem:[#allocation5 + $0x198] sm:$0xff]
    %v97 = vld [vmem:[#allocation5 + $0x1a0] sm:$0xff]
    %v98 = vld [vmem:[#allocation5 + $0x1a8] sm:$0xff]
    %v99 = vld [vmem:[#allocation5 + $0x1b0] sm:$0xff]
    %v100 = vld [vmem:[#allocation5 + $0x1b8] sm:$0xff]
    %v101 = vld [vmem:[#allocation5 + $0x1c0] sm:$0xff]
    %v102 = vld [vmem:[#allocation5 + $0x1c8] sm:$0xff]
    %v103 = vld [vmem:[#allocation5 + $0x1d0] sm:$0xff]
    %v104 = vld [vmem:[#allocation5 + $0x1d8] sm:$0xff]
    %v105 = vld [vmem:[#allocation5 + $0x1e0] sm:$0xff]
    %v106 = vld [vmem:[#allocation5 + $0x1e8] sm:$0xff]
    %v107 = vld [vmem:[#allocation5 + $0x1f0] sm:$0xff]
    %v108 = vld [vmem:[#allocation5 + $0x1f8] sm:$0xff]
    %v109 = vld [vmem:[%s2] sm:$0x1]
    %v111 = vlaneseq
    %v112 = vshrl.u32 %v111, 7
    %v113 = vsub.s32 0, %v112
    %v114 = vrot.slane %v109, %v113
    %116 = vmatprep.subr.mxu0 0.0
    %117 = vmatpush1.msra.mxu0 %v45
    %118 = vmatprep.subr.mxu0 0.0
    %119 = vmatpush1.msra.mxu0 %v46
    %120 = vmatprep.subr.mxu0 0.0
    %121 = vmatpush1.msra.mxu0 %v47
    %122 = vmatprep.subr.mxu0 0.0
    %123 = vmatpush1.msra.mxu0 %v48
    %124 = vmatprep.subr.mxu0 0.0
    %125 = vmatpush1.msra.mxu0 %v49
    %126 = vmatprep.subr.mxu0 0.0
    %127 = vmatpush1.msra.mxu0 %v50
    %128 = vmatprep.subr.mxu0 0.0
    %129 = vmatpush1.msra.mxu0 %v51
    %130 = vmatprep.subr.mxu0 0.0
    %131 = vmatpush1.msra.mxu0 %v52
    %132 = vmatprep.subr.mxu0 0.0
    %133 = vmatpush1.msra.mxu0 %v53
    %134 = vmatprep.subr.mxu0 0.0
    %135 = vmatpush1.msra.mxu0 %v54
    %136 = vmatprep.subr.mxu0 0.0
    %137 = vmatpush1.msra.mxu0 %v55
    %138 = vmatprep.subr.mxu0 0.0
    %139 = vmatpush1.msra.mxu0 %v56
    %140 = vmatprep.subr.mxu0 0.0
    %141 = vmatpush1.msra.mxu0 %v57
    %142 = vmatprep.subr.mxu0 0.0
    %143 = vmatpush1.msra.mxu0 %v58
    %144 = vmatprep.subr.mxu0 0.0
    %145 = vmatpush1.msra.mxu0 %v59
    %146 = vmatprep.subr.mxu0 0.0
    %147 = vmatpush1.msra.mxu0 %v60
    %148 = vmatprep.subr.mxu0 0.0
    %149 = vmatpush1.msra.mxu0 %v61
    %150 = vmatprep.subr.mxu0 0.0
    %151 = vmatpush1.msra.mxu0 %v62
    %152 = vmatprep.subr.mxu0 0.0
    %153 = vmatpush1.msra.mxu0 %v63
    %154 = vmatprep.subr.mxu0 0.0
    %155 = vmatpush1.msra.mxu0 %v64
    %156 = vmatprep.subr.mxu0 0.0
    %157 = vmatpush1.msra.mxu0 %v65
    %158 = vmatprep.subr.mxu0 0.0
    %159 = vmatpush1.msra.mxu0 %v66
    %160 = vmatprep.subr.mxu0 0.0
    %161 = vmatpush1.msra.mxu0 %v67
    %162 = vmatprep.subr.mxu0 0.0
    %163 = vmatpush1.msra.mxu0 %v68
    %164 = vmatprep.subr.mxu0 0.0
    %165 = vmatpush1.msra.mxu0 %v69
    %166 = vmatprep.subr.mxu0 0.0
    %167 = vmatpush1.msra.mxu0 %v70
    %168 = vmatprep.subr.mxu0 0.0
    %169 = vmatpush1.msra.mxu0 %v71
    %170 = vmatprep.subr.mxu0 0.0
    %171 = vmatpush1.msra.mxu0 %v72
    %172 = vmatprep.subr.mxu0 0.0
    %173 = vmatpush1.msra.mxu0 %v73
    %174 = vmatprep.subr.mxu0 0.0
    %175 = vmatpush1.msra.mxu0 %v74
    %176 = vmatprep.subr.mxu0 0.0
    %177 = vmatpush1.msra.mxu0 %v75
    %178 = vmatprep.subr.mxu0 0.0
    %179 = vmatpush1.msra.mxu0 %v76
    %180 = vmatprep.mubr.f32.mxu0 %v42
    %181 = vmatmul.mubr.f32.gmra.mrb[0].mxu0 %v41
    %v182 = vpop.f32.mrb[0].mxu0
    %v183 = vadd.f32 %v114, %v182
    %v184 = vpop.f32.mrb[0].mxu0
    %185 = vdwg.mxu0
    %186 = vmatprep.subr.mxu0 0.0
    %187 = vmatpush1.msra.mxu0 %v77
    %188 = vmatprep.subr.mxu0 0.0
    %189 = vmatpush1.msra.mxu0 %v78
    %190 = vmatprep.subr.mxu0 0.0
    %191 = vmatpush1.msra.mxu0 %v79
    %192 = vmatprep.subr.mxu0 0.0
    %193 = vmatpush1.msra.mxu0 %v80
    %194 = vmatprep.subr.mxu0 0.0
    %195 = vmatpush1.msra.mxu0 %v81
    %196 = vmatprep.subr.mxu0 0.0
    %197 = vmatpush1.msra.mxu0 %v82
    %198 = vmatprep.subr.mxu0 0.0
    %199 = vmatpush1.msra.mxu0 %v83
    %200 = vmatprep.subr.mxu0 0.0
    %201 = vmatpush1.msra.mxu0 %v84
    %202 = vmatprep.subr.mxu0 0.0
    %203 = vmatpush1.msra.mxu0 %v85
    %204 = vmatprep.subr.mxu0 0.0
    %205 = vmatpush1.msra.mxu0 %v86
    %206 = vmatprep.subr.mxu0 0.0
    %207 = vmatpush1.msra.mxu0 %v87
    %208 = vmatprep.subr.mxu0 0.0
    %209 = vmatpush1.msra.mxu0 %v88
    %210 = vmatprep.subr.mxu0 0.0
    %211 = vmatpush1.msra.mxu0 %v89
    %212 = vmatprep.subr.mxu0 0.0
    %213 = vmatpush1.msra.mxu0 %v90
    %214 = vmatprep.subr.mxu0 0.0
    %215 = vmatpush1.msra.mxu0 %v91
    %216 = vmatprep.subr.mxu0 0.0
    %217 = vmatpush1.msra.mxu0 %v92
    %218 = vmatprep.subr.mxu0 0.0
    %219 = vmatpush1.msra.mxu0 %v93
    %220 = vmatprep.subr.mxu0 0.0
    %221 = vmatpush1.msra.mxu0 %v94
    %222 = vmatprep.subr.mxu0 0.0
    %223 = vmatpush1.msra.mxu0 %v95
    %224 = vmatprep.subr.mxu0 0.0
    %225 = vmatpush1.msra.mxu0 %v96
    %226 = vmatprep.subr.mxu0 0.0
    %227 = vmatpush1.msra.mxu0 %v97
    %228 = vmatprep.subr.mxu0 0.0
    %229 = vmatpush1.msra.mxu0 %v98
    %230 = vmatprep.subr.mxu0 0.0
    %231 = vmatpush1.msra.mxu0 %v99
    %232 = vmatprep.subr.mxu0 0.0
    %233 = vmatpush1.msra.mxu0 %v100
    %234 = vmatprep.subr.mxu0 0.0
    %235 = vmatpush1.msra.mxu0 %v101
    %236 = vmatprep.subr.mxu0 0.0
    %237 = vmatpush1.msra.mxu0 %v102
    %238 = vmatprep.subr.mxu0 0.0
    %239 = vmatpush1.msra.mxu0 %v103
    %240 = vmatprep.subr.mxu0 0.0
    %241 = vmatpush1.msra.mxu0 %v104
    %242 = vmatprep.subr.mxu0 0.0
    %243 = vmatpush1.msra.mxu0 %v105
    %244 = vmatprep.subr.mxu0 0.0
    %245 = vmatpush1.msra.mxu0 %v106
    %246 = vmatprep.subr.mxu0 0.0
    %247 = vmatpush1.msra.mxu0 %v107
    %248 = vmatprep.subr.mxu0 0.0
    %249 = vmatpush1.msra.mxu0 %v108
    %250 = vmatprep.mubr.f32.mxu0 %v44
    %251 = vmatmul.mubr.f32.gmra.mrb[0].mxu0 %v43
    %v252 = vpop.f32.mrb[0].mxu0
    %v253 = vadd.f32 %v183, %v252
    %v254 = vpop.f32.mrb[0].mxu0
    %255 = vdwg.mxu0
    %256 = vst [vmem:[#allocation7] sm:$0xff] %v253
    // Predicated region
    $region22: #{adaptive_mlp_forward.1} parent=1 // pred_check
      _
    $region23: #{adaptive_mlp_forward.1} parent=1 // pred_check_branch
      %258 = sbr.rel (0) target = $region25
    $region24: #{adaptive_mlp_forward.1} parent=1 // pred_region
      %s260 = ssub.s32 128, 128
      %261 = vsyncadd [#allocation4], %s260
      %s263 = sshll.u32 [#allocation7], 4
      %s264 = int_to_ptr.vmem [resolvable:$true] %s263
      %266 = dma.vmem_to_hbm [thread:$0]  %s264, 128, %s3, [#allocation4]
    $region25: #{adaptive_mlp_forward.1} parent=1 // pred_fallthru
      _
    // Predicated region
    $region26: #{adaptive_mlp_forward.1} parent=1 // pred_check
      _
    $region27: #{adaptive_mlp_forward.1} parent=1 // pred_check_branch
      %268 = sbr.rel (0) target = $region29
    $region28: #{adaptive_mlp_forward.1} parent=1 // pred_region
      %269 = dma.done [#allocation4], 128
    $region29: #{adaptive_mlp_forward.1} parent=1 // pred_fallthru
      _
    %270 = vsyncpa [#allocation3], 1
    %271 = vsyncpa [#allocation6], 1
    %272 = vsyncpa [#allocation4], 1

</llo_original>
